<compile_context>
chip_gen: v5e
topology: v5e:2x2
jax: 0.10.0
libtpu: 0.0.40
codegen_flags: <defaults>
</compile_context>

<pallas_src>
import numpy as np
import jax
import jax.numpy as jnp
from jax.experimental import pallas as pl
from jax.experimental.pallas import tpu as pltpu


# ----------------------------- config (small, deterministic) -----------------------------
class Config:
    use_resnet_embedding = True
    image_H = 16
    image_W = 16
    patch_size = 4
    embed_dim = 32
    embed_dropout = 0.0   # p=0.0 -> dropout is the identity, matching nn.Dropout(0.0)


# ----------------------- sinusoid positional table (same math as module) -----------------
def get_sinusoid_embedding(n_position, d_hid):
    def angle_vec(pos):
        return [pos / np.power(10000, 2 * (j // 2) / d_hid) for j in range(d_hid)]
    table = np.array([angle_vec(p) for p in range(n_position)], dtype=np.float64)
    table[:, 0::2] = np.sin(table[:, 0::2])
    table[:, 1::2] = np.cos(table[:, 1::2])
    return jnp.asarray(table, dtype=jnp.float32)          # [N, D]  (module keeps [1, N, D])


# ----------------------------------- Pallas kernels --------------------------------------
def _conv1_t_kernel(colsT_ref, w1T_ref, b1_ref, o_ref):
    # colsT: (1, Kp, HW) bf16, w1T: (D, Kp) bf16, b1: (D, 1) f32 -> o: (1, D, HW) f32
    y = jnp.dot(w1T_ref[...], colsT_ref[0], preferred_element_type=jnp.float32)
    o_ref[0] = jnp.maximum(y + b1_ref[...], 0.0)


def _patch_embed_kernel(p_ref, w2_ref, b2_ref, pos_ref, o_ref):
    # p: (1, N, K2) bf16, w2: (K2, D) bf16, b2: (1, D) f32, pos: (N, D) f32 -> o: (1, N, D) f32
    y = jnp.dot(p_ref[0], w2_ref[...], preferred_element_type=jnp.float32)
    o_ref[0] = y + b2_ref[...] + pos_ref[...]


def pallas_conv1_transposed(colsT, w1T, b1_col):
    B, Kp, HW = colsT.shape
    D = w1T.shape[0]
    return pl.pallas_call(
        _conv1_t_kernel,
        out_shape=jax.ShapeDtypeStruct((B, D, HW), jnp.float32),
        grid=(B,),
        in_specs=[
            pl.BlockSpec((1, Kp, HW), lambda b: (b, 0, 0)),
            pl.BlockSpec((D, Kp), lambda b: (0, 0)),
            pl.BlockSpec((D, 1), lambda b: (0, 0)),
        ],
        out_specs=pl.BlockSpec((1, D, HW), lambda b: (b, 0, 0)),
        compiler_params=pltpu.CompilerParams(dimension_semantics=("parallel",)),
    )(colsT, w1T, b1_col)


def pallas_patch_embed(patches, w2, b2, pos):
    B, N, K2 = patches.shape
    D = w2.shape[1]
    return pl.pallas_call(
        _patch_embed_kernel,
        out_shape=jax.ShapeDtypeStruct((B, N, D), jnp.float32),
        grid=(B,),
        in_specs=[
            pl.BlockSpec((1, N, K2), lambda b: (b, 0, 0)),
            pl.BlockSpec((K2, D), lambda b: (0, 0)),
            pl.BlockSpec((1, D), lambda b: (0, 0)),
            pl.BlockSpec((N, D), lambda b: (0, 0)),
        ],
        out_specs=pl.BlockSpec((1, N, D), lambda b: (b, 0, 0)),
        compiler_params=pltpu.CompilerParams(dimension_semantics=("parallel",)),
    )(patches, w2, b2, pos)


# ------------------------------------- glue (plain JAX) ----------------------------------
def im2col_3x3_nchw_T(x_nchw, k_pad):
    """3x3 / stride 1 / pad 1 im2col, transposed: [B, Kp, H*W]; K order (kh, kw, c), zero-padded."""
    B, C, H, W = x_nchw.shape
    xp = jnp.pad(x_nchw, ((0, 0), (0, 0), (1, 1), (1, 1)))
    slabs = [xp[:, :, kh:kh + H, kw:kw + W] for kh in range(3) for kw in range(3)]
    cols = jnp.concatenate(slabs, axis=1).reshape(B, 9 * C, H * W)
    return jnp.pad(cols, ((0, 0), (0, k_pad - 9 * C), (0, 0)))


def patchify_nchw(r, P):
    """[B, D, H, W] -> [B, N, P*P*D]; last-dim order (ph, pw, c); row-major patch order."""
    B, D, H, W = r.shape
    t = r.reshape(B, D, H // P, P, W // P, P)
    t = t.transpose(0, 2, 4, 3, 5, 1)                                    # [B, hp, wp, ph, pw, D]
    return t.reshape(B, (H // P) * (W // P), P * P * D)


def init_params(cfg, key):
    D, P = cfg.embed_dim, cfg.patch_size
    N = (cfg.image_H // P) * (cfg.image_W // P)
    k1, k2, k3, k4 = jax.random.split(key, 4)
    return {
        "w1": 0.1 * jax.random.normal(k1, (D, 3, 3, 3), jnp.float32),    # OIHW (stand-in resnet)
        "b1": 0.1 * jax.random.normal(k2, (1, D), jnp.float32),
        "w2": 0.05 * jax.random.normal(k3, (D, D, P, P), jnp.float32),   # OIHW (patch_embeddings)
        "b2": 0.05 * jax.random.normal(k4, (1, D), jnp.float32),
        "pos": get_sinusoid_embedding(N, D),                             # [N, D], frozen
    }


def embeddings_forward(x_nchw, params, cfg):
    """Returns (embeddings [B, N, D], resnet_out [B, D, H, W]) -- same as the PyTorch module."""
    D, P = cfg.embed_dim, cfg.patch_size
    B, C, H, W = x_nchw.shape
    K_PAD = 32                                                           # 27 -> 32 aligned K

    # MiniResNet stand-in: 3x3 conv (3 -> D) + ReLU as a transposed im2col matmul.
    # Transposed output [D, H*W] is lane-dense and is already NCHW (no final transpose).
    colsT = im2col_3x3_nchw_T(x_nchw.astype(jnp.float32), K_PAD).astype(jnp.bfloat16)
    w1T = jnp.transpose(params["w1"], (0, 2, 3, 1)).reshape(D, 9 * C)    # [D, (kh,kw,c)]
    w1T = jnp.pad(w1T, ((0, 0), (0, K_PAD - 9 * C))).astype(jnp.bfloat16)
    b1_col = params["b1"].reshape(D, 1)
    resnet_flat = pallas_conv1_transposed(colsT, w1T, b1_col)            # [B, D, H*W] f32
    resnet_out = resnet_flat.reshape(B, D, H, W)                         # NCHW, reshape only

    # patch_embeddings: Conv2d(D, D, kernel=P, stride=P) == per-patch matmul,
    # then flatten(2).transpose(-1,-2) + position_embeddings, fused in one Pallas kernel.
    patches = patchify_nchw(resnet_out, P).astype(jnp.bfloat16)          # [B, N, P*P*D]
    w2 = jnp.transpose(params["w2"], (2, 3, 1, 0)).reshape(P * P * D, D).astype(jnp.bfloat16)
    emb = pallas_patch_embed(patches, w2, params["b2"], params["pos"])   # [B, N, D] f32

    # dropout(p=0.0) -> identity
    return emb, resnet_out


# ------------------------------- reference (pure JAX) for sanity -------------------------
def embeddings_reference(x_nchw, params, cfg):
    D, P = cfg.embed_dim, cfg.patch_size
    x = x_nchw.astype(jnp.float32)
    r = jax.lax.conv_general_dilated(x, params["w1"], (1, 1), ((1, 1), (1, 1)),
                                     dimension_numbers=("NCHW", "OIHW", "NCHW"))
    r = jnp.maximum(r + params["b1"].reshape(1, D, 1, 1), 0.0)           # resnet stand-in
    y = jax.lax.conv_general_dilated(r, params["w2"], (P, P), "VALID",
                                     dimension_numbers=("NCHW", "OIHW", "NCHW"))
    y = y + params["b2"].reshape(1, D, 1, 1)
    B = x.shape[0]
    y = y.reshape(B, D, -1).transpose(0, 2, 1)                           # flatten(2).transpose
    y = y + params["pos"][None]
    return y, r


if __name__ == "__main__":
    cfg = Config()
    key = jax.random.PRNGKey(0)
    kx, kp = jax.random.split(key)
    x = jax.random.normal(kx, (2, 3, cfg.image_H, cfg.image_W), jnp.float32)
    params = init_params(cfg, kp)

    emb, resnet_out = jax.jit(lambda a: embeddings_forward(a, params, cfg))(x)
    emb = jax.block_until_ready(emb)
    resnet_out = jax.block_until_ready(resnet_out)

    emb_ref, resnet_ref = embeddings_reference(x, params, cfg)
    np.testing.assert_allclose(np.asarray(resnet_out), np.asarray(resnet_ref), rtol=5e-2, atol=5e-2)
    np.testing.assert_allclose(np.asarray(emb), np.asarray(emb_ref), rtol=5e-2, atol=5e-2)

    assert emb.shape == (2, (cfg.image_H // cfg.patch_size) * (cfg.image_W // cfg.patch_size), cfg.embed_dim)
    assert resnet_out.shape == (2, cfg.embed_dim, cfg.image_H, cfg.image_W)
    print("KERNEL_OK")
</pallas_src>

<mosaic_0001>
module attributes {stable_mosaic.version = 11 : i64} {
  func.func @_conv1_t_kernel(%arg0: i32, %arg1: memref<1x32x256xbf16, #tpu.memory_space<vmem>>, %arg2: memref<32x32xbf16, #tpu.memory_space<vmem>>, %arg3: memref<32x1xf32, #tpu.memory_space<vmem>>, %arg4: memref<1x32x256xf32, #tpu.memory_space<vmem>>) attributes {dimension_semantics = [#tpu.dimension_semantics<parallel>], iteration_bounds = array<i64: 2>, scalar_prefetch = 0 : i64, scratch_operands = 0 : i64, tpu.core_type = #tpu.core_type<tc>, window_params = [{transform_indices = @transform_0, window_bounds = array<i64: 1, 32, 256>}, {pipeline_mode = #tpu.pipeline_mode<synchronous>, transform_indices = @transform_1, window_bounds = array<i64: 32, 32>}, {pipeline_mode = #tpu.pipeline_mode<synchronous>, transform_indices = @transform_2, window_bounds = array<i64: 32, 1>}, {transform_indices = @transform_3, window_bounds = array<i64: 1, 32, 256>}]} {
    %c0 = arith.constant 0 : index
    %c0_0 = arith.constant 0 : index
    %0 = vector.load %arg2[%c0, %c0_0] : memref<32x32xbf16, #tpu.memory_space<vmem>>, vector<32x32xbf16>
    %c0_1 = arith.constant 0 : index
    %c0_2 = arith.constant 0 : index
    %c0_3 = arith.constant 0 : index
    %1 = vector.load %arg1[%c0_1, %c0_2, %c0_3] : memref<1x32x256xbf16, #tpu.memory_space<vmem>>, vector<1x32x256xbf16>
    %2 = vector.shape_cast %1 : vector<1x32x256xbf16> to vector<32x256xbf16>
    %cst = arith.constant dense<0.000000e+00> : vector<32x256xf32>
    %3 = tpu.matmul %0, %2, %cst {dimension_numbers = #tpu.dot_dimension_numbers<[1], [0], [0], [1], [0, 0, 1, 1], [], []>} : vector<32x32xbf16>, vector<32x256xbf16>, vector<32x256xf32> -> vector<32x256xf32>
    %c0_4 = arith.constant 0 : index
    %c0_5 = arith.constant 0 : index
    %4 = vector.load %arg3[%c0_4, %c0_5] : memref<32x1xf32, #tpu.memory_space<vmem>>, vector<32x1xf32>
    %5 = vector.broadcast %4 : vector<32x1xf32> to vector<32x256xf32>
    %6 = arith.addf %3, %5 : vector<32x256xf32>
    %cst_6 = arith.constant 0.000000e+00 : f32
    %7 = vector.broadcast %cst_6 : f32 to vector<32x256xf32>
    %8 = arith.maximumf %6, %7 : vector<32x256xf32>
    %c0_7 = arith.constant 0 : index
    %c0_8 = arith.constant 0 : index
    %c0_9 = arith.constant 0 : index
    %9 = vector.load %arg4[%c0_7, %c0_8, %c0_9] : memref<1x32x256xf32, #tpu.memory_space<vmem>>, vector<1x32x256xf32>
    %10 = vector.shape_cast %9 : vector<1x32x256xf32> to vector<32x256xf32>
    %11 = vector.shape_cast %8 : vector<32x256xf32> to vector<1x32x256xf32>
    tpu.vector_store %arg4[%c0_7, %c0_8, %c0_9], %11 {strides = array<i32>} : memref<1x32x256xf32, #tpu.memory_space<vmem>>, vector<1x32x256xf32>,
    return
  }
  func.func @transform_0(%arg0: i32) -> (i32, i32, i32) {
    %c0_i32 = arith.constant 0 : i32
    %c0_i32_0 = arith.constant 0 : i32
    %c0_i32_1 = arith.constant 0 : i32
    return %arg0, %c0_i32, %c0_i32_0 : i32, i32, i32
  }
  func.func @transform_1(%arg0: i32) -> (i32, i32) {
    %c0_i32 = arith.constant 0 : i32
    %c0_i32_0 = arith.constant 0 : i32
    %c0_i32_1 = arith.constant 0 : i32
    return %c0_i32, %c0_i32_0 : i32, i32
  }
  func.func @transform_2(%arg0: i32) -> (i32, i32) {
    %c0_i32 = arith.constant 0 : i32
    %c0_i32_0 = arith.constant 0 : i32
    %c0_i32_1 = arith.constant 0 : i32
    return %c0_i32, %c0_i32_0 : i32, i32
  }
  func.func @transform_3(%arg0: i32) -> (i32, i32, i32) {
    %c0_i32 = arith.constant 0 : i32
    %c0_i32_0 = arith.constant 0 : i32
    %c0_i32_1 = arith.constant 0 : i32
    return %arg0, %c0_i32, %c0_i32_0 : i32, i32, i32
  }
}

module attributes {stable_mosaic.version = 11 : i64} {
  func.func @_patch_embed_kernel(%arg0: i32, %arg1: memref<1x16x512xbf16, #tpu.memory_space<vmem>>, %arg2: memref<512x32xbf16, #tpu.memory_space<vmem>>, %arg3: memref<1x32xf32, #tpu.memory_space<vmem>>, %arg4: memref<16x32xf32, #tpu.memory_space<vmem>>, %arg5: memref<1x16x32xf32, #tpu.memory_space<vmem>>) attributes {dimension_semantics = [#tpu.dimension_semantics<parallel>], iteration_bounds = array<i64: 2>, scalar_prefetch = 0 : i64, scratch_operands = 0 : i64, tpu.core_type = #tpu.core_type<tc>, window_params = [{transform_indices = @transform_0, window_bounds = array<i64: 1, 16, 512>}, {pipeline_mode = #tpu.pipeline_mode<synchronous>, transform_indices = @transform_1, window_bounds = array<i64: 512, 32>}, {pipeline_mode = #tpu.pipeline_mode<synchronous>, transform_indices = @transform_2, window_bounds = array<i64: 1, 32>}, {pipeline_mode = #tpu.pipeline_mode<synchronous>, transform_indices = @transform_3, window_bounds = array<i64: 16, 32>}, {transform_indices = @transform_4, window_bounds = array<i64: 1, 16, 32>}]} {
    %c0 = arith.constant 0 : index
    %c0_0 = arith.constant 0 : index
    %c0_1 = arith.constant 0 : index
    %0 = vector.load %arg1[%c0, %c0_0, %c0_1] : memref<1x16x512xbf16, #tpu.memory_space<vmem>>, vector<1x16x512xbf16>
    %1 = vector.shape_cast %0 : vector<1x16x512xbf16> to vector<16x512xbf16>
    %c0_2 = arith.constant 0 : index
    %c0_3 = arith.constant 0 : index
    %2 = vector.load %arg2[%c0_2, %c0_3] : memref<512x32xbf16, #tpu.memory_space<vmem>>, vector<512x32xbf16>
    %cst = arith.constant dense<0.000000e+00> : vector<16x32xf32>
    %3 = tpu.matmul %1, %2, %cst {dimension_numbers = #tpu.dot_dimension_numbers<[1], [0], [0], [1], [0, 0, 1, 1], [], []>} : vector<16x512xbf16>, vector<512x32xbf16>, vector<16x32xf32> -> vector<16x32xf32>
    %c0_4 = arith.constant 0 : index
    %c0_5 = arith.constant 0 : index
    %4 = vector.load %arg3[%c0_4, %c0_5] : memref<1x32xf32, #tpu.memory_space<vmem>>, vector<1x32xf32>
    %5 = vector.broadcast %4 : vector<1x32xf32> to vector<16x32xf32>
    %6 = arith.addf %3, %5 : vector<16x32xf32>
    %c0_6 = arith.constant 0 : index
    %c0_7 = arith.constant 0 : index
    %7 = vector.load %arg4[%c0_6, %c0_7] : memref<16x32xf32, #tpu.memory_space<vmem>>, vector<16x32xf32>
    %8 = arith.addf %6, %7 : vector<16x32xf32>
    %c0_8 = arith.constant 0 : index
    %c0_9 = arith.constant 0 : index
    %c0_10 = arith.constant 0 : index
    %9 = vector.load %arg5[%c0_8, %c0_9, %c0_10] : memref<1x16x32xf32, #tpu.memory_space<vmem>>, vector<1x16x32xf32>
    %10 = vector.shape_cast %9 : vector<1x16x32xf32> to vector<16x32xf32>
    %11 = vector.shape_cast %8 : vector<16x32xf32> to vector<1x16x32xf32>
    tpu.vector_store %arg5[%c0_8, %c0_9, %c0_10], %11 {strides = array<i32>} : memref<1x16x32xf32, #tpu.memory_space<vmem>>, vector<1x16x32xf32>,
    return
  }
  func.func @transform_0(%arg0: i32) -> (i32, i32, i32) {
    %c0_i32 = arith.constant 0 : i32
    %c0_i32_0 = arith.constant 0 : i32
    %c0_i32_1 = arith.constant 0 : i32
    return %arg0, %c0_i32, %c0_i32_0 : i32, i32, i32
  }
  func.func @transform_1(%arg0: i32) -> (i32, i32) {
    %c0_i32 = arith.constant 0 : i32
    %c0_i32_0 = arith.constant 0 : i32
    %c0_i32_1 = arith.constant 0 : i32
    return %c0_i32, %c0_i32_0 : i32, i32
  }
  func.func @transform_2(%arg0: i32) -> (i32, i32) {
    %c0_i32 = arith.constant 0 : i32
    %c0_i32_0 = arith.constant 0 : i32
    %c0_i32_1 = arith.constant 0 : i32
    return %c0_i32, %c0_i32_0 : i32, i32
  }
  func.func @transform_3(%arg0: i32) -> (i32, i32) {
    %c0_i32 = arith.constant 0 : i32
    %c0_i32_0 = arith.constant 0 : i32
    %c0_i32_1 = arith.constant 0 : i32
    return %c0_i32, %c0_i32_0 : i32, i32
  }
  func.func @transform_4(%arg0: i32) -> (i32, i32, i32) {
    %c0_i32 = arith.constant 0 : i32
    %c0_i32_0 = arith.constant 0 : i32
    %c0_i32_1 = arith.constant 0 : i32
    return %arg0, %c0_i32, %c0_i32_0 : i32, i32, i32
  }
}

</mosaic_0001>

<llo_original>
// kernel: _lambda_.2
$region0: #{_lambda_.2}
  #allocation0 [shape = 'u32[]', space=smem, size = 0x4, offset = 0x4, fixed_abs, tag = 'smem constant byte address 0x4 - core index']
  #allocation1 [shape = 'u32[72,128]{1,0:T(1,128)}', space=vmem, size = 0x9000, scoped, tag = 'internal scratch']
  %s0 = inlined_call_operand.vmem [shape: bf16[2,32,256], index: 0, kind: input, shape index: {}]
  %s1 = inlined_call_operand.vmem [shape: bf16[32,32], index: 1, kind: input, shape index: {}]
  %s2 = inlined_call_operand.vmem [shape: f32[32,1], index: 2, kind: input, shape index: {}]
  %s3 = inlined_call_operand.vmem [shape: f32[2,32,256], index: 3, kind: output, shape index: {}]
  %s4 = sld [smem:[#allocation0]]
  $region45: #{_lambda_.2} parent=0
    _
  %s6 = ssub.s32 1, %s4
  %s7 = scalar_select 0, %s6, %s4
  loop: start=0, step=1, limit=4
  $region2: #{_lambda_.2} parent=0 // loop_pre_header
    _
  $region3: #{_lambda_.2} parent=0 // loop_header
    %s9 = sphi 0, %s13
    %p10 = scmp.ge.s32.totalorder %s9, 4
    %s19 = sphi 0, %s21
    %s22 = sphi 0, %s19
    %s23 = sphi 0, %s22
    %s39 = sphi 0, %s23
    %s43 = sphi 0, %s43
    %s45 = sphi 0, %s43
    %s46 = sphi 0, %s45
    %s60 = sphi 0, %s46
    %s64 = sphi 0, %s64
    %s66 = sphi 0, %s64
    %s67 = sphi 0, %s66
    %s81 = sphi 0, %s67
    %s87 = sphi 0, %s89
    %s90 = sphi 0, %s87
    %s91 = sphi 0, %s90
    %s107 = sphi 0, %s91
  $region4: #{_lambda_.2} parent=0 // loop_header_branch
    %12 = sbr.rel (%p10) target = $region8
  $region5: #{_lambda_.2} parent=0 // loop_body
    %s14 = ssub.s32 %s9, 1
    %s15 = ssub.s32 %s9, 2
    %s16 = sadd.s32 %s9, 1
    %s17 = ssub.s32 %s9, %s16
    %p18 = scmp.eq.s32.totalorder %s17, 0
    %s20 = sadd.s32 %s19, 1
    %s21 = scalar_select %p18, %s19, %s20
    %p24 = pneg %p18
    %p25 = scmp.eq.s32.totalorder %s9, 1
    %p26 = por %p24, %p25
    %p27 = scmp.ne.s32.totalorder %s19, %s22
    %p28 = scmp.eq.s32.totalorder %s9, 0
    %p29 = por %p27, %p28
    %p30 = scmp.ne.s32.totalorder %s19, %s22
    %p31 = scmp.eq.s32.totalorder %s14, 1
    %p32 = por %p30, %p31
    %p33 = scmp.ne.s32.totalorder %s22, %s23
    %p34 = scmp.eq.s32.totalorder %s14, 0
    %p35 = por %p33, %p34
    %p36 = scmp.ne.s32.totalorder %s22, %s23
    %p37 = scmp.eq.s32.totalorder %s15, 1
    %p38 = por %p36, %p37
    %p40 = scmp.ne.s32.totalorder %s23, %s39
    %p41 = scmp.eq.s32.totalorder %s15, 0
    %p42 = por %p40, %p41
    %s44 = sadd.s32 %s43, 1
    %p47 = scmp.eq.s32.totalorder %s9, 1
    %p48 = scmp.ne.s32.totalorder %s43, %s45
    %p49 = scmp.eq.s32.totalorder %s9, 0
    %p50 = por %p48, %p49
    %p51 = scmp.ne.s32.totalorder %s43, %s45
    %p52 = scmp.eq.s32.totalorder %s14, 1
    %p53 = por %p51, %p52
    %p54 = scmp.ne.s32.totalorder %s45, %s46
    %p55 = scmp.eq.s32.totalorder %s14, 0
    %p56 = por %p54, %p55
    %p57 = scmp.ne.s32.totalorder %s45, %s46
    %p58 = scmp.eq.s32.totalorder %s15, 1
    %p59 = por %p57, %p58
    %p61 = scmp.ne.s32.totalorder %s46, %s60
    %p62 = scmp.eq.s32.totalorder %s15, 0
    %p63 = por %p61, %p62
    %s65 = sadd.s32 %s64, 1
    %p68 = scmp.eq.s32.totalorder %s9, 1
    %p69 = scmp.ne.s32.totalorder %s64, %s66
    %p70 = scmp.eq.s32.totalorder %s9, 0
    %p71 = por %p69, %p70
    %p72 = scmp.ne.s32.totalorder %s64, %s66
    %p73 = scmp.eq.s32.totalorder %s14, 1
    %p74 = por %p72, %p73
    %p75 = scmp.ne.s32.totalorder %s66, %s67
    %p76 = scmp.eq.s32.totalorder %s14, 0
    %p77 = por %p75, %p76
    %p78 = scmp.ne.s32.totalorder %s66, %s67
    %p79 = scmp.eq.s32.totalorder %s15, 1
    %p80 = por %p78, %p79
    %p82 = scmp.ne.s32.totalorder %s67, %s81
    %p83 = scmp.eq.s32.totalorder %s15, 0
    %p84 = por %p82, %p83
    %s85 = ssub.s32 %s9, %s16
    %p86 = scmp.eq.s32.totalorder %s85, 0
    %s88 = sadd.s32 %s87, 1
    %s89 = scalar_select %p86, %s87, %s88
    %p92 = pneg %p86
    %p93 = scmp.eq.s32.totalorder %s9, 1
    %p94 = por %p92, %p93
    %p95 = scmp.ne.s32.totalorder %s87, %s90
    %p96 = scmp.eq.s32.totalorder %s9, 0
    %p97 = por %p95, %p96
    %p98 = scmp.ne.s32.totalorder %s87, %s90
    %p99 = scmp.eq.s32.totalorder %s14, 1
    %p100 = por %p98, %p99
    %p101 = scmp.ne.s32.totalorder %s90, %s91
    %p102 = scmp.eq.s32.totalorder %s14, 0
    %p103 = por %p101, %p102
    %p104 = scmp.ne.s32.totalorder %s90, %s91
    %p105 = scmp.eq.s32.totalorder %s15, 1
    %p106 = por %p104, %p105
    %p108 = scmp.ne.s32.totalorder %s91, %s107
    %p109 = scmp.eq.s32.totalorder %s15, 0
    %p110 = por %p108, %p109
    %p111 = scmp.le.s32.totalorder 1, %s9
    %p112 = scmp.lt.s32.totalorder %s9, 3
    %p113 = pnand %p111, %p112
    %p114 = pneg %p113
    // Predicated region
    $region9: #{_lambda_.2} parent=5 // pred_check
      _
    $region10: #{_lambda_.2} parent=5 // pred_check_branch
      %116 = sbr.rel (%p113) target = $region12
    $region11: #{_lambda_.2} parent=5 // pred_region
      %s117 = ssub.s32 %s9, 1
      // Predicated region
      $region13: #{_lambda_.2} parent=11 // pred_check
        %p118 = pneg %p56
      $region14: #{_lambda_.2} parent=11 // pred_check_branch
        %120 = sbr.rel (%p118) target = $region16
      $region15: #{_lambda_.2} parent=11 // pred_region
        _
      $region16: #{_lambda_.2} parent=11 // pred_fallthru
        _
      // Predicated region
      $region17: #{_lambda_.2} parent=11 // pred_check
        %p121 = pneg %p77
      $region18: #{_lambda_.2} parent=11 // pred_check_branch
        %123 = sbr.rel (%p121) target = $region20
      $region19: #{_lambda_.2} parent=11 // pred_region
        _
      $region20: #{_lambda_.2} parent=11 // pred_fallthru
        _
    $region12: #{_lambda_.2} parent=5 // pred_fallthru
      _
    %p124 = scmp.lt.s32.totalorder %s9, 2
    // Predicated region
    $region21: #{_lambda_.2} parent=5 // pred_check
      %p125 = pneg %p124
    $region22: #{_lambda_.2} parent=5 // pred_check_branch
      %127 = sbr.rel (%p125) target = $region24
    $region23: #{_lambda_.2} parent=5 // pred_region
      // Predicated region
      $region25: #{_lambda_.2} parent=23 // pred_check
        %p128 = pneg %p29
      $region26: #{_lambda_.2} parent=23 // pred_check_branch
        %130 = sbr.rel (%p128) target = $region28
      $region27: #{_lambda_.2} parent=23 // pred_region
        %p131 = scmp.lt.s32.totalorder %s9, 1
        %s132 = scalar_select %p131, %s9, 1
        %s133 = smul.addr %s132, 8
        %s134 = smul.addr %s133, 4
        %s135 = scalar_lea.vmem %s0, %s134
      $region28: #{_lambda_.2} parent=23 // pred_fallthru
        _
    $region24: #{_lambda_.2} parent=5 // pred_fallthru
      _
    %p136 = scmp.le.s32.totalorder 1, %s9
    %p137 = scmp.lt.s32.totalorder %s9, 3
    %p138 = pnand %p136, %p137
    %p139 = pneg %p138
    // Predicated region
    $region29: #{_lambda_.2} parent=5 // pred_check
      _
    $region30: #{_lambda_.2} parent=5 // pred_check_branch
      %141 = sbr.rel (%p138) target = $region32
    $region31: #{_lambda_.2} parent=5 // pred_region
      %s142 = ssub.s32 %s9, 1
      %p143 = scmp.lt.s32.totalorder %s14, 1
      %s144 = scalar_select %p143, %s14, 1
      %s145 = smul.addr %s144, 8
      %s146 = smul.addr %s145, 4
      %s147 = scalar_lea.vmem %s0, %s146
      %p148 = pneg %p35
      %p149 = pneg %p32
      %p150 = pneg %p56
      %p151 = pneg %p53
      %p152 = pneg %p77
      %p153 = pneg %p74
      %p154 = pneg %p103
      %p155 = pneg %p100
      %p156 = scmp.lt.s32.totalorder %s14, 1
      %s157 = scalar_select %p156, %s14, 1
      %s158 = smul.addr %s157, 8
      %s159 = smul.addr %s158, 8
      %s160 = scalar_lea.vmem %s3, %s159
      %p161 = scmp.lt.s32.totalorder %s14, 1
      %s162 = scalar_select %p161, %s14, 1
      %s163 = smul.addr %s162, 8
      %s164 = smul.addr %s163, 4
      %s165 = scalar_lea.vmem %s0, %s164
      %p166 = scmp.lt.s32.totalorder %s14, 1
      %s167 = scalar_select %p166, %s14, 1
      %s168 = smul.addr %s167, 8
      %s169 = smul.addr %s168, 8
      %s170 = scalar_lea.vmem %s3, %s169
      %v172 = vld [vmem:[%s1] sm:$0xf]
      %v173 = vld [vmem:[%s1 + $0x4] sm:$0xf]
      %v174 = vld [vmem:[%s1 + $0x8] sm:$0xf]
      %v175 = vld [vmem:[%s1 + $0xc] sm:$0xf]
      %v176 = vld [vmem:[%s165] sm:$0xff]
      %v177 = vld [vmem:[%s165 + $0x8] sm:$0xff]
      %v178 = vld [vmem:[%s165 + $0x10] sm:$0xff]
      %v179 = vld [vmem:[%s165 + $0x18] sm:$0xff]
      %v180 = vld [vmem:[%s2] sm:$0xff]
      %v181 = vld [vmem:[%s2 + $0x8] sm:$0xff]
      %v182 = vld [vmem:[%s2 + $0x10] sm:$0xff]
      %v183 = vld [vmem:[%s2 + $0x18] sm:$0xff]
      %185 = vset.pattern.permute.xlu0 0
      %186 = vperm.xlu0 %185, %v180
      %v187 = vpop.permute.xlu0 %186
      %190 = vset.pattern.permute.xlu0 0
      %191 = vperm.xlu0 %190, %v181
      %v192 = vpop.permute.xlu0 %191
      %195 = vset.pattern.permute.xlu0 0
      %196 = vperm.xlu0 %195, %v182
      %v197 = vpop.permute.xlu0 %196
      %200 = vset.pattern.permute.xlu0 0
      %201 = vperm.xlu0 %200, %v183
      %v202 = vpop.permute.xlu0 %201
      %v208 = vunpack.c.l.b16 %v172
      %v209 = vunpack.c.l.b16 %v173
      %v210 = vunpack.c.l.b16 %v174
      %v211 = vunpack.c.l.b16 %v175
      %v212 = vpack.c.b16 %v209, %v208
      %v213 = vpack.c.b16 %v211, %v210
      %v218 = vunpack.c.l.b16 %v176
      %v219 = vunpack.c.h.b16 %v176
      %v220 = vunpack.c.l.b16 %v177
      %v221 = vunpack.c.h.b16 %v177
      %v222 = vunpack.c.l.b16 %v178
      %v223 = vunpack.c.h.b16 %v178
      %v224 = vunpack.c.l.b16 %v179
      %v225 = vunpack.c.h.b16 %v179
      %v226 = vpack.c.b16 %v220, %v218
      %v227 = vpack.c.b16 %v221, %v219
      %v228 = vpack.c.b16 %v224, %v222
      %v229 = vpack.c.b16 %v225, %v223
      %vm234 = vcmask 261120
      %v236 = vsel %vm234, %v212, 0
      %v239 = vsel %vm234, %v213, 0
      %241 = vmatpush.bf16.msra.mxu0 0
      %242 = vmatpush.bf16.msra.mxu0 0
      %243 = vmatpush.bf16.msra.mxu0 0
      %244 = vmatpush.bf16.msra.mxu0 0
      %245 = vmatpush.bf16.msra.mxu0 0
      %246 = vmatpush.bf16.msra.mxu0 0
      %247 = vmatpush.bf16.msra.mxu0 %v228
      %248 = vmatpush.bf16.msra.mxu0 %v226
      %249 = vmatmul.bf16.gmra.mxu0 %v236
      %v250 = vpop.f32.mrf.mxu0
      %v251 = vadd.f32 %v187, %v250
      %v252 = vpop.f32.mrf.mxu0
      %v253 = vadd.f32 %v192, %v252
      %254 = vmatmul.bf16.gmra.mxu0 %v239
      %v255 = vpop.f32.mrf.mxu0
      %v256 = vadd.f32 %v197, %v255
      %v257 = vpop.f32.mrf.mxu0
      %v258 = vadd.f32 %v202, %v257
      %259 = vdwg.mxu0
      %260 = vmatpush.bf16.msra.mxu0 0
      %261 = vmatpush.bf16.msra.mxu0 0
      %262 = vmatpush.bf16.msra.mxu0 0
      %263 = vmatpush.bf16.msra.mxu0 0
      %264 = vmatpush.bf16.msra.mxu0 0
      %265 = vmatpush.bf16.msra.mxu0 0
      %266 = vmatpush.bf16.msra.mxu0 %v229
      %267 = vmatpush.bf16.msra.mxu0 %v227
      %268 = vmatmul.bf16.gmra.mxu0 %v236
      %v269 = vpop.f32.mrf.mxu0
      %v270 = vadd.f32 %v187, %v269
      %v271 = vpop.f32.mrf.mxu0
      %v272 = vadd.f32 %v192, %v271
      %273 = vmatmul.bf16.gmra.mxu0 %v239
      %v274 = vpop.f32.mrf.mxu0
      %v275 = vadd.f32 %v197, %v274
      %v276 = vpop.f32.mrf.mxu0
      %v277 = vadd.f32 %v202, %v276
      %278 = vdwg.mxu0
      %v279 = vmax.f32 %v251, 0.0
      %v280 = vmax.f32 %v270, 0.0
      %v281 = vmax.f32 %v253, 0.0
      %v282 = vmax.f32 %v272, 0.0
      %v283 = vmax.f32 %v256, 0.0
      %v284 = vmax.f32 %v275, 0.0
      %v285 = vmax.f32 %v258, 0.0
      %v286 = vmax.f32 %v277, 0.0
      %287 = vst [vmem:[%s170] sm:$0xff] %v279
      %288 = vst [vmem:[%s170 + $0x8] sm:$0xff] %v280
      %289 = vst [vmem:[%s170 + $0x10] sm:$0xff] %v281
      %290 = vst [vmem:[%s170 + $0x18] sm:$0xff] %v282
      %291 = vst [vmem:[%s170 + $0x20] sm:$0xff] %v283
      %292 = vst [vmem:[%s170 + $0x28] sm:$0xff] %v284
      %293 = vst [vmem:[%s170 + $0x30] sm:$0xff] %v285
      %294 = vst [vmem:[%s170 + $0x38] sm:$0xff] %v286
      %p295 = scmp.lt.s32.totalorder %s14, 1
      %s296 = scalar_select %p295, %s14, 1
      %s297 = smul.addr %s296, 8
      %s298 = smul.addr %s297, 8
      %s299 = scalar_lea.vmem %s3, %s298
      // Predicated region
      $region33: #{_lambda_.2} parent=31 // pred_check
        %p300 = pneg %p100
      $region34: #{_lambda_.2} parent=31 // pred_check_branch
        %302 = sbr.rel (%p300) target = $region36
      $region35: #{_lambda_.2} parent=31 // pred_region
        _
      $region36: #{_lambda_.2} parent=31 // pred_fallthru
        _
    $region32: #{_lambda_.2} parent=5 // pred_fallthru
      _
    %p303 = scmp.le.s32.totalorder 2, %s9
    // Predicated region
    $region37: #{_lambda_.2} parent=5 // pred_check
      %p304 = pneg %p303
    $region38: #{_lambda_.2} parent=5 // pred_check_branch
      %306 = sbr.rel (%p304) target = $region40
    $region39: #{_lambda_.2} parent=5 // pred_region
      %s307 = ssub.s32 %s9, 2
      // Predicated region
      $region41: #{_lambda_.2} parent=39 // pred_check
        %p308 = pneg %p106
      $region42: #{_lambda_.2} parent=39 // pred_check_branch
        %310 = sbr.rel (%p308) target = $region44
      $region43: #{_lambda_.2} parent=39 // pred_region
        %p311 = scmp.lt.s32.totalorder %s15, 1
        %s312 = scalar_select %p311, %s15, 1
        %s313 = smul.addr %s312, 8
        %s314 = smul.addr %s313, 8
        %s315 = scalar_lea.vmem %s3, %s314
      $region44: #{_lambda_.2} parent=39 // pred_fallthru
        _
    $region40: #{_lambda_.2} parent=5 // pred_fallthru
      _
  $region6: #{_lambda_.2} parent=0 // loop_footer
    %s13 = sadd.s32 1, %s9
  $region7: #{_lambda_.2} parent=0 // loop_footer_branch
    %8 = sbr.rel target = $region3
  $region8: #{_lambda_.2} parent=0 // loop_exit
    _

// kernel: _lambda_.3
$region0: #{_lambda_.3}
  #allocation0 [shape = 'u32[]', space=smem, size = 0x4, offset = 0x4, fixed_abs, tag = 'smem constant byte address 0x4 - core index']
  #allocation1 [shape = 'u32[72,128]{1,0:T(1,128)}', space=vmem, size = 0x9000, scoped, tag = 'internal scratch']
  %s0 = inlined_call_operand.vmem [shape: bf16[2,16,512], index: 0, kind: input, shape index: {}]
  %s1 = inlined_call_operand.vmem [shape: bf16[512,32], index: 1, kind: input, shape index: {}]
  %s2 = inlined_call_operand.vmem [shape: f32[1,32], index: 2, kind: input, shape index: {}]
  %s3 = inlined_call_operand.vmem [shape: f32[16,32], index: 3, kind: input, shape index: {}]
  %s4 = inlined_call_operand.hbm [shape: f32[2,16,32], index: 4, kind: output, shape index: {}]
  %s5 = sld [smem:[#allocation0]]
  $region49: #{_lambda_.3} parent=0
    _
  %s7 = ssub.s32 1, %s5
  %s8 = scalar_select 0, %s7, %s5
  $region1: #{_lambda_.3} parent=0
    #allocation2 [shape = 'u8[16384]{0}', space=vmem, size = 0x4000, scoped, tag = 'output window, operand 0']
    #allocation3 [shape = 's32[2]{0}', space=sflag, size = 0x8, scoped, tag = 'scoped memory for _lambda_.3']
    %9 = vsyncpa [#allocation3], 0
    %s10 = scalar_lea.sflag [#allocation3], 1
    %11 = vsyncpa %s10, 0
    loop: start=0, step=1, limit=4
    $region2: #{_lambda_.3} parent=1 // loop_pre_header
      _
    $region3: #{_lambda_.3} parent=1 // loop_header
      %s13 = sphi 0, %s17
      %p14 = scmp.ge.s32.totalorder %s13, 4
      %s23 = sphi 0, %s25
      %s26 = sphi 0, %s23
      %s27 = sphi 0, %s26
      %s43 = sphi 0, %s27
      %s47 = sphi 0, %s47
      %s49 = sphi 0, %s47
      %s50 = sphi 0, %s49
      %s64 = sphi 0, %s50
      %s68 = sphi 0, %s68
      %s70 = sphi 0, %s68
      %s71 = sphi 0, %s70
      %s85 = sphi 0, %s71
      %s89 = sphi 0, %s89
      %s91 = sphi 0, %s89
      %s92 = sphi 0, %s91
      %s106 = sphi 0, %s92
      %s112 = sphi 0, %s114
      %s115 = sphi 0, %s112
      %s116 = sphi 0, %s115
      %s132 = sphi 0, %s116
    $region4: #{_lambda_.3} parent=1 // loop_header_branch
      %16 = sbr.rel (%p14) target = $region8
    $region5: #{_lambda_.3} parent=1 // loop_body
      %s18 = ssub.s32 %s13, 1
      %s19 = ssub.s32 %s13, 2
      %s20 = sadd.s32 %s13, 1
      %s21 = ssub.s32 %s13, %s20
      %p22 = scmp.eq.s32.totalorder %s21, 0
      %s24 = sadd.s32 %s23, 1
      %s25 = scalar_select %p22, %s23, %s24
      %p28 = pneg %p22
      %p29 = scmp.eq.s32.totalorder %s13, 1
      %p30 = por %p28, %p29
      %p31 = scmp.ne.s32.totalorder %s23, %s26
      %p32 = scmp.eq.s32.totalorder %s13, 0
      %p33 = por %p31, %p32
      %p34 = scmp.ne.s32.totalorder %s23, %s26
      %p35 = scmp.eq.s32.totalorder %s18, 1
      %p36 = por %p34, %p35
      %p37 = scmp.ne.s32.totalorder %s26, %s27
      %p38 = scmp.eq.s32.totalorder %s18, 0
      %p39 = por %p37, %p38
      %p40 = scmp.ne.s32.totalorder %s26, %s27
      %p41 = scmp.eq.s32.totalorder %s19, 1
      %p42 = por %p40, %p41
      %p44 = scmp.ne.s32.totalorder %s27, %s43
      %p45 = scmp.eq.s32.totalorder %s19, 0
      %p46 = por %p44, %p45
      %s48 = sadd.s32 %s47, 1
      %p51 = scmp.eq.s32.totalorder %s13, 1
      %p52 = scmp.ne.s32.totalorder %s47, %s49
      %p53 = scmp.eq.s32.totalorder %s13, 0
      %p54 = por %p52, %p53
      %p55 = scmp.ne.s32.totalorder %s47, %s49
      %p56 = scmp.eq.s32.totalorder %s18, 1
      %p57 = por %p55, %p56
      %p58 = scmp.ne.s32.totalorder %s49, %s50
      %p59 = scmp.eq.s32.totalorder %s18, 0
      %p60 = por %p58, %p59
      %p61 = scmp.ne.s32.totalorder %s49, %s50
      %p62 = scmp.eq.s32.totalorder %s19, 1
      %p63 = por %p61, %p62
      %p65 = scmp.ne.s32.totalorder %s50, %s64
      %p66 = scmp.eq.s32.totalorder %s19, 0
      %p67 = por %p65, %p66
      %s69 = sadd.s32 %s68, 1
      %p72 = scmp.eq.s32.totalorder %s13, 1
      %p73 = scmp.ne.s32.totalorder %s68, %s70
      %p74 = scmp.eq.s32.totalorder %s13, 0
      %p75 = por %p73, %p74
      %p76 = scmp.ne.s32.totalorder %s68, %s70
      %p77 = scmp.eq.s32.totalorder %s18, 1
      %p78 = por %p76, %p77
      %p79 = scmp.ne.s32.totalorder %s70, %s71
      %p80 = scmp.eq.s32.totalorder %s18, 0
      %p81 = por %p79, %p80
      %p82 = scmp.ne.s32.totalorder %s70, %s71
      %p83 = scmp.eq.s32.totalorder %s19, 1
      %p84 = por %p82, %p83
      %p86 = scmp.ne.s32.totalorder %s71, %s85
      %p87 = scmp.eq.s32.totalorder %s19, 0
      %p88 = por %p86, %p87
      %s90 = sadd.s32 %s89, 1
      %p93 = scmp.eq.s32.totalorder %s13, 1
      %p94 = scmp.ne.s32.totalorder %s89, %s91
      %p95 = scmp.eq.s32.totalorder %s13, 0
      %p96 = por %p94, %p95
      %p97 = scmp.ne.s32.totalorder %s89, %s91
      %p98 = scmp.eq.s32.totalorder %s18, 1
      %p99 = por %p97, %p98
      %p100 = scmp.ne.s32.totalorder %s91, %s92
      %p101 = scmp.eq.s32.totalorder %s18, 0
      %p102 = por %p100, %p101
      %p103 = scmp.ne.s32.totalorder %s91, %s92
      %p104 = scmp.eq.s32.totalorder %s19, 1
      %p105 = por %p103, %p104
      %p107 = scmp.ne.s32.totalorder %s92, %s106
      %p108 = scmp.eq.s32.totalorder %s19, 0
      %p109 = por %p107, %p108
      %s110 = ssub.s32 %s13, %s20
      %p111 = scmp.eq.s32.totalorder %s110, 0
      %s113 = sadd.s32 %s112, 1
      %s114 = scalar_select %p111, %s112, %s113
      %p117 = pneg %p111
      %p118 = scmp.eq.s32.totalorder %s13, 1
      %p119 = por %p117, %p118
      %p120 = scmp.ne.s32.totalorder %s112, %s115
      %p121 = scmp.eq.s32.totalorder %s13, 0
      %p122 = por %p120, %p121
      %p123 = scmp.ne.s32.totalorder %s112, %s115
      %p124 = scmp.eq.s32.totalorder %s18, 1
      %p125 = por %p123, %p124
      %p126 = scmp.ne.s32.totalorder %s115, %s116
      %p127 = scmp.eq.s32.totalorder %s18, 0
      %p128 = por %p126, %p127
      %p129 = scmp.ne.s32.totalorder %s115, %s116
      %p130 = scmp.eq.s32.totalorder %s19, 1
      %p131 = por %p129, %p130
      %p133 = scmp.ne.s32.totalorder %s116, %s132
      %p134 = scmp.eq.s32.totalorder %s19, 0
      %p135 = por %p133, %p134
      %p136 = scmp.le.s32.totalorder 1, %s13
      %p137 = scmp.lt.s32.totalorder %s13, 3
      %p138 = pnand %p136, %p137
      %p139 = pneg %p138
      // Predicated region
      $region9: #{_lambda_.3} parent=5 // pred_check
        _
      $region10: #{_lambda_.3} parent=5 // pred_check_branch
        %141 = sbr.rel (%p138) target = $region12
      $region11: #{_lambda_.3} parent=5 // pred_region
        %s142 = ssub.s32 %s13, 1
        // Predicated region
        $region13: #{_lambda_.3} parent=11 // pred_check
          %p143 = pneg %p60
        $region14: #{_lambda_.3} parent=11 // pred_check_branch
          %145 = sbr.rel (%p143) target = $region16
        $region15: #{_lambda_.3} parent=11 // pred_region
          _
        $region16: #{_lambda_.3} parent=11 // pred_fallthru
          _
        // Predicated region
        $region17: #{_lambda_.3} parent=11 // pred_check
          %p146 = pneg %p81
        $region18: #{_lambda_.3} parent=11 // pred_check_branch
          %148 = sbr.rel (%p146) target = $region20
        $region19: #{_lambda_.3} parent=11 // pred_region
          _
        $region20: #{_lambda_.3} parent=11 // pred_fallthru
          _
        // Predicated region
        $region21: #{_lambda_.3} parent=11 // pred_check
          %p149 = pneg %p102
        $region22: #{_lambda_.3} parent=11 // pred_check_branch
          %151 = sbr.rel (%p149) target = $region24
        $region23: #{_lambda_.3} parent=11 // pred_region
          _
        $region24: #{_lambda_.3} parent=11 // pred_fallthru
          _
      $region12: #{_lambda_.3} parent=5 // pred_fallthru
        _
      %p152 = scmp.lt.s32.totalorder %s13, 2
      // Predicated region
      $region25: #{_lambda_.3} parent=5 // pred_check
        %p153 = pneg %p152
      $region26: #{_lambda_.3} parent=5 // pred_check_branch
        %155 = sbr.rel (%p153) target = $region28
      $region27: #{_lambda_.3} parent=5 // pred_region
        // Predicated region
        $region29: #{_lambda_.3} parent=27 // pred_check
          %p156 = pneg %p33
        $region30: #{_lambda_.3} parent=27 // pred_check_branch
          %158 = sbr.rel (%p156) target = $region32
        $region31: #{_lambda_.3} parent=27 // pred_region
          %p159 = scmp.lt.s32.totalorder %s13, 1
          %s160 = scalar_select %p159, %s13, 1
          %s161 = smul.addr %s160, 8
          %s162 = smul.addr %s161, 4
          %s163 = scalar_lea.vmem %s0, %s162
        $region32: #{_lambda_.3} parent=27 // pred_fallthru
          _
      $region28: #{_lambda_.3} parent=5 // pred_fallthru
        _
      %p164 = scmp.le.s32.totalorder 1, %s13
      %p165 = scmp.lt.s32.totalorder %s13, 3
      %p166 = pnand %p164, %p165
      %p167 = pneg %p166
      // Predicated region
      $region33: #{_lambda_.3} parent=5 // pred_check
        _
      $region34: #{_lambda_.3} parent=5 // pred_check_branch
        %169 = sbr.rel (%p166) target = $region36
      $region35: #{_lambda_.3} parent=5 // pred_region
        %s170 = ssub.s32 %s13, 1
        %p171 = scmp.lt.s32.totalorder %s18, 1
        %s172 = scalar_select %p171, %s18, 1
        %s173 = smul.addr %s172, 8
        %s174 = smul.addr %s173, 4
        %s175 = scalar_lea.vmem %s0, %s174
        %p176 = pneg %p39
        %p177 = pneg %p36
        %p178 = pneg %p60
        %p179 = pneg %p57
        %p180 = pneg %p81
        %p181 = pneg %p78
        %p182 = pneg %p102
        %p183 = pneg %p99
        %p184 = pneg %p128
        %p185 = pneg %p125
        %s186 = sand.u32 %s115, 1
        %s187 = scalar_lea.sflag [#allocation3], %s186
        %s188 = sand.u32 %s115, 1
        %s189 = smul.addr %s188, 16
        %s190 = scalar_lea.vmem [#allocation2], %s189
        %p191 = scmp.lt.s32.totalorder %s18, 1
        %s192 = scalar_select %p191, %s18, 1
        %s193 = smul.addr %s192, 8
        %s194 = smul.addr %s193, 4
        %s195 = scalar_lea.vmem %s0, %s194
        %v196 = vld [vmem:[%s195] sm:$0xff]
        %v197 = vld [vmem:[%s195 + $0x8] sm:$0xff]
        %v198 = vld [vmem:[%s195 + $0x10] sm:$0xff]
        %v199 = vld [vmem:[%s195 + $0x18] sm:$0xff]
        %v200 = vld [vmem:[%s1] sm:$0xf]
        %v201 = vld [vmem:[%s1 + $0x4] sm:$0xf]
        %v202 = vld [vmem:[%s1 + $0x8] sm:$0xf]
        %v203 = vld [vmem:[%s1 + $0xc] sm:$0xf]
        %v204 = vld [vmem:[%s1 + $0x10] sm:$0xf]
        %v205 = vld [vmem:[%s1 + $0x14] sm:$0xf]
        %v206 = vld [vmem:[%s1 + $0x18] sm:$0xf]
        %v207 = vld [vmem:[%s1 + $0x1c] sm:$0xf]
        %v208 = vld [vmem:[%s1 + $0x20] sm:$0xf]
        %v209 = vld [vmem:[%s1 + $0x24] sm:$0xf]
        %v210 = vld [vmem:[%s1 + $0x28] sm:$0xf]
        %v211 = vld [vmem:[%s1 + $0x2c] sm:$0xf]
        %v212 = vld [vmem:[%s1 + $0x30] sm:$0xf]
        %v213 = vld [vmem:[%s1 + $0x34] sm:$0xf]
        %v214 = vld [vmem:[%s1 + $0x38] sm:$0xf]
        %v215 = vld [vmem:[%s1 + $0x3c] sm:$0xf]
        %v216 = vld [vmem:[%s1 + $0x40] sm:$0xf]
        %v217 = vld [vmem:[%s1 + $0x44] sm:$0xf]
        %v218 = vld [vmem:[%s1 + $0x48] sm:$0xf]
        %v219 = vld [vmem:[%s1 + $0x4c] sm:$0xf]
        %v220 = vld [vmem:[%s1 + $0x50] sm:$0xf]
        %v221 = vld [vmem:[%s1 + $0x54] sm:$0xf]
        %v222 = vld [vmem:[%s1 + $0x58] sm:$0xf]
        %v223 = vld [vmem:[%s1 + $0x5c] sm:$0xf]
        %v224 = vld [vmem:[%s1 + $0x60] sm:$0xf]
        %v225 = vld [vmem:[%s1 + $0x64] sm:$0xf]
        %v226 = vld [vmem:[%s1 + $0x68] sm:$0xf]
        %v227 = vld [vmem:[%s1 + $0x6c] sm:$0xf]
        %v228 = vld [vmem:[%s1 + $0x70] sm:$0xf]
        %v229 = vld [vmem:[%s1 + $0x74] sm:$0xf]
        %v230 = vld [vmem:[%s1 + $0x78] sm:$0xf]
        %v231 = vld [vmem:[%s1 + $0x7c] sm:$0xf]
        %v232 = vld [vmem:[%s1 + $0x80] sm:$0xf]
        %v233 = vld [vmem:[%s1 + $0x84] sm:$0xf]
        %v234 = vld [vmem:[%s1 + $0x88] sm:$0xf]
        %v235 = vld [vmem:[%s1 + $0x8c] sm:$0xf]
        %v236 = vld [vmem:[%s1 + $0x90] sm:$0xf]
        %v237 = vld [vmem:[%s1 + $0x94] sm:$0xf]
        %v238 = vld [vmem:[%s1 + $0x98] sm:$0xf]
        %v239 = vld [vmem:[%s1 + $0x9c] sm:$0xf]
        %v240 = vld [vmem:[%s1 + $0xa0] sm:$0xf]
        %v241 = vld [vmem:[%s1 + $0xa4] sm:$0xf]
        %v242 = vld [vmem:[%s1 + $0xa8] sm:$0xf]
        %v243 = vld [vmem:[%s1 + $0xac] sm:$0xf]
        %v244 = vld [vmem:[%s1 + $0xb0] sm:$0xf]
        %v245 = vld [vmem:[%s1 + $0xb4] sm:$0xf]
        %v246 = vld [vmem:[%s1 + $0xb8] sm:$0xf]
        %v247 = vld [vmem:[%s1 + $0xbc] sm:$0xf]
        %v248 = vld [vmem:[%s1 + $0xc0] sm:$0xf]
        %v249 = vld [vmem:[%s1 + $0xc4] sm:$0xf]
        %v250 = vld [vmem:[%s1 + $0xc8] sm:$0xf]
        %v251 = vld [vmem:[%s1 + $0xcc] sm:$0xf]
        %v252 = vld [vmem:[%s1 + $0xd0] sm:$0xf]
        %v253 = vld [vmem:[%s1 + $0xd4] sm:$0xf]
        %v254 = vld [vmem:[%s1 + $0xd8] sm:$0xf]
        %v255 = vld [vmem:[%s1 + $0xdc] sm:$0xf]
        %v256 = vld [vmem:[%s1 + $0xe0] sm:$0xf]
        %v257 = vld [vmem:[%s1 + $0xe4] sm:$0xf]
        %v258 = vld [vmem:[%s1 + $0xe8] sm:$0xf]
        %v259 = vld [vmem:[%s1 + $0xec] sm:$0xf]
        %v260 = vld [vmem:[%s1 + $0xf0] sm:$0xf]
        %v261 = vld [vmem:[%s1 + $0xf4] sm:$0xf]
        %v262 = vld [vmem:[%s1 + $0xf8] sm:$0xf]
        %v263 = vld [vmem:[%s1 + $0xfc] sm:$0xf]
        %v264 = vld [vmem:[%s2] sm:$0x1]
        %v266 = vperm.slane %v264, 0
        %v272 = vunpack.c.l.b16 %v196
        %v273 = vunpack.c.h.b16 %v196
        %v274 = vunpack.c.l.b16 %v197
        %v275 = vunpack.c.h.b16 %v197
        %v276 = vunpack.c.l.b16 %v198
        %v277 = vunpack.c.h.b16 %v198
        %v278 = vunpack.c.l.b16 %v199
        %v279 = vunpack.c.h.b16 %v199
        %v280 = vpack.c.b16 %v276, %v272
        %v281 = vpack.c.b16 %v277, %v273
        %v282 = vpack.c.b16 %v278, %v274
        %v283 = vpack.c.b16 %v279, %v275
        %v352 = vunpack.c.l.b16 %v200
        %v353 = vunpack.c.l.b16 %v201
        %v354 = vunpack.c.l.b16 %v202
        %v355 = vunpack.c.l.b16 %v203
        %v356 = vunpack.c.l.b16 %v204
        %v357 = vunpack.c.l.b16 %v205
        %v358 = vunpack.c.l.b16 %v206
        %v359 = vunpack.c.l.b16 %v207
        %v360 = vunpack.c.l.b16 %v208
        %v361 = vunpack.c.l.b16 %v209
        %v362 = vunpack.c.l.b16 %v210
        %v363 = vunpack.c.l.b16 %v211
        %v364 = vunpack.c.l.b16 %v212
        %v365 = vunpack.c.l.b16 %v213
        %v366 = vunpack.c.l.b16 %v214
        %v367 = vunpack.c.l.b16 %v215
        %v368 = vunpack.c.l.b16 %v216
        %v369 = vunpack.c.l.b16 %v217
        %v370 = vunpack.c.l.b16 %v218
        %v371 = vunpack.c.l.b16 %v219
        %v372 = vunpack.c.l.b16 %v220
        %v373 = vunpack.c.l.b16 %v221
        %v374 = vunpack.c.l.b16 %v222
        %v375 = vunpack.c.l.b16 %v223
        %v376 = vunpack.c.l.b16 %v224
        %v377 = vunpack.c.l.b16 %v225
        %v378 = vunpack.c.l.b16 %v226
        %v379 = vunpack.c.l.b16 %v227
        %v380 = vunpack.c.l.b16 %v228
        %v381 = vunpack.c.l.b16 %v229
        %v382 = vunpack.c.l.b16 %v230
        %v383 = vunpack.c.l.b16 %v231
        %v384 = vunpack.c.l.b16 %v232
        %v385 = vunpack.c.l.b16 %v233
        %v386 = vunpack.c.l.b16 %v234
        %v387 = vunpack.c.l.b16 %v235
        %v388 = vunpack.c.l.b16 %v236
        %v389 = vunpack.c.l.b16 %v237
        %v390 = vunpack.c.l.b16 %v238
        %v391 = vunpack.c.l.b16 %v239
        %v392 = vunpack.c.l.b16 %v240
        %v393 = vunpack.c.l.b16 %v241
        %v394 = vunpack.c.l.b16 %v242
        %v395 = vunpack.c.l.b16 %v243
        %v396 = vunpack.c.l.b16 %v244
        %v397 = vunpack.c.l.b16 %v245
        %v398 = vunpack.c.l.b16 %v246
        %v399 = vunpack.c.l.b16 %v247
        %v400 = vunpack.c.l.b16 %v248
        %v401 = vunpack.c.l.b16 %v249
        %v402 = vunpack.c.l.b16 %v250
        %v403 = vunpack.c.l.b16 %v251
        %v404 = vunpack.c.l.b16 %v252
        %v405 = vunpack.c.l.b16 %v253
        %v406 = vunpack.c.l.b16 %v254
        %v407 = vunpack.c.l.b16 %v255
        %v408 = vunpack.c.l.b16 %v256
        %v409 = vunpack.c.l.b16 %v257
        %v410 = vunpack.c.l.b16 %v258
        %v411 = vunpack.c.l.b16 %v259
        %v412 = vunpack.c.l.b16 %v260
        %v413 = vunpack.c.l.b16 %v261
        %v414 = vunpack.c.l.b16 %v262
        %v415 = vunpack.c.l.b16 %v263
        %v416 = vpack.c.b16 %v353, %v352
        %v417 = vpack.c.b16 %v355, %v354
        %v418 = vpack.c.b16 %v357, %v356
        %v419 = vpack.c.b16 %v359, %v358
        %v420 = vpack.c.b16 %v361, %v360
        %v421 = vpack.c.b16 %v363, %v362
        %v422 = vpack.c.b16 %v365, %v364
        %v423 = vpack.c.b16 %v367, %v366
        %v424 = vpack.c.b16 %v369, %v368
        %v425 = vpack.c.b16 %v371, %v370
        %v426 = vpack.c.b16 %v373, %v372
        %v427 = vpack.c.b16 %v375, %v374
        %v428 = vpack.c.b16 %v377, %v376
        %v429 = vpack.c.b16 %v379, %v378
        %v430 = vpack.c.b16 %v381, %v380
        %v431 = vpack.c.b16 %v383, %v382
        %v432 = vpack.c.b16 %v385, %v384
        %v433 = vpack.c.b16 %v387, %v386
        %v434 = vpack.c.b16 %v389, %v388
        %v435 = vpack.c.b16 %v391, %v390
        %v436 = vpack.c.b16 %v393, %v392
        %v437 = vpack.c.b16 %v395, %v394
        %v438 = vpack.c.b16 %v397, %v396
        %v439 = vpack.c.b16 %v399, %v398
        %v440 = vpack.c.b16 %v401, %v400
        %v441 = vpack.c.b16 %v403, %v402
        %v442 = vpack.c.b16 %v405, %v404
        %v443 = vpack.c.b16 %v407, %v406
        %v444 = vpack.c.b16 %v409, %v408
        %v445 = vpack.c.b16 %v411, %v410
        %v446 = vpack.c.b16 %v413, %v412
        %v447 = vpack.c.b16 %v415, %v414
        %480 = vmatpush.bf16.msra.mxu0 %v423
        %481 = vmatpush.bf16.msra.mxu0 %v422
        %482 = vmatpush.bf16.msra.mxu0 %v421
        %483 = vmatpush.bf16.msra.mxu0 %v420
        %484 = vmatpush.bf16.msra.mxu0 %v419
        %485 = vmatpush.bf16.msra.mxu0 %v418
        %486 = vmatpush.bf16.msra.mxu0 %v417
        %487 = vmatpush.bf16.msra.mxu0 %v416
        %488 = vmatmul.bf16.gmra.mxu0 %v280
        %v489 = vpop.f32.mrf.mxu0
        %v490 = vadd.f32 %v266, %v489
        %v491 = vpop.f32.mrf.mxu0
        %v492 = vadd.f32 %v266, %v491
        %493 = vdwg.mxu0
        %494 = vmatpush.bf16.msra.mxu0 %v431
        %495 = vmatpush.bf16.msra.mxu0 %v430
        %496 = vmatpush.bf16.msra.mxu0 %v429
        %497 = vmatpush.bf16.msra.mxu0 %v428
        %498 = vmatpush.bf16.msra.mxu0 %v427
        %499 = vmatpush.bf16.msra.mxu0 %v426
        %500 = vmatpush.bf16.msra.mxu0 %v425
        %501 = vmatpush.bf16.msra.mxu0 %v424
        %502 = vmatmul.bf16.gmra.mxu0 %v281
        %v503 = vpop.f32.mrf.mxu0
        %v504 = vadd.f32 %v490, %v503
        %v505 = vpop.f32.mrf.mxu0
        %v506 = vadd.f32 %v492, %v505
        %507 = vdwg.mxu0
        %508 = vmatpush.bf16.msra.mxu0 %v439
        %509 = vmatpush.bf16.msra.mxu0 %v438
        %510 = vmatpush.bf16.msra.mxu0 %v437
        %511 = vmatpush.bf16.msra.mxu0 %v436
        %512 = vmatpush.bf16.msra.mxu0 %v435
        %513 = vmatpush.bf16.msra.mxu0 %v434
        %514 = vmatpush.bf16.msra.mxu0 %v433
        %515 = vmatpush.bf16.msra.mxu0 %v432
        %516 = vmatmul.bf16.gmra.mxu0 %v282
        %v517 = vpop.f32.mrf.mxu0
        %v518 = vadd.f32 %v504, %v517
        %v519 = vpop.f32.mrf.mxu0
        %v520 = vadd.f32 %v506, %v519
        %521 = vdwg.mxu0
        %522 = vmatpush.bf16.msra.mxu0 %v447
        %523 = vmatpush.bf16.msra.mxu0 %v446
        %524 = vmatpush.bf16.msra.mxu0 %v445
        %525 = vmatpush.bf16.msra.mxu0 %v444
        %526 = vmatpush.bf16.msra.mxu0 %v443
        %527 = vmatpush.bf16.msra.mxu0 %v442
        %528 = vmatpush.bf16.msra.mxu0 %v441
        %529 = vmatpush.bf16.msra.mxu0 %v440
        %530 = vmatmul.bf16.gmra.mxu0 %v283
        %v531 = vpop.f32.mrf.mxu0
        %v532 = vadd.f32 %v518, %v531
        %v533 = vpop.f32.mrf.mxu0
        %v534 = vadd.f32 %v520, %v533
        %535 = vdwg.mxu0
        %v536 = vld [vmem:[%s3] sm:$0xff]
        %v537 = vld [vmem:[%s3 + $0x8] sm:$0xff]
        %v538 = vadd.f32 %v532, %v536
        %v539 = vadd.f32 %v534, %v537
        %vm540 = vcmask 261120
        %541 = vst.msk [vmem:[%s190] sm:$0xff] %vm540, %v538
        %542 = vst.msk [vmem:[%s190 + $0x8] sm:$0xff] %vm540, %v539
        %s543 = sand.u32 %s115, 1
        %s544 = scalar_lea.sflag [#allocation3], %s543
        %s545 = sand.u32 %s115, 1
        %s546 = smul.addr %s545, 16
        %s547 = scalar_lea.vmem [#allocation2], %s546
        // Predicated region
        $region37: #{_lambda_.3} parent=35 // pred_check
          %p548 = pneg %p125
        $region38: #{_lambda_.3} parent=35 // pred_check_branch
          %550 = sbr.rel (%p548) target = $region40
        $region39: #{_lambda_.3} parent=35 // pred_region
          %552 = vsyncadd %s544, 0
          %s553 = smul.addr %s18, 2
          %s554 = smul.addr %s553, 8
          %s555 = scalar_lea.hbm %s4, %s554
          %s556 = sshll.u32 %s547, 4
          %s557 = int_to_ptr.vmem [resolvable:$true] %s556
          %s558 = sshll.u32 %s555, 4
          %s559 = int_to_ptr.hbm [resolvable:$true] %s558
          %564 = dma.vmem_to_hbm [thread:$0]  %s557, 256, %s559, %s544, 128, 128, 8
        $region40: #{_lambda_.3} parent=35 // pred_fallthru
          _
      $region36: #{_lambda_.3} parent=5 // pred_fallthru
        _
      %p565 = scmp.le.s32.totalorder 2, %s13
      // Predicated region
      $region41: #{_lambda_.3} parent=5 // pred_check
        %p566 = pneg %p565
      $region42: #{_lambda_.3} parent=5 // pred_check_branch
        %568 = sbr.rel (%p566) target = $region44
      $region43: #{_lambda_.3} parent=5 // pred_region
        %s569 = ssub.s32 %s13, 2
        // Predicated region
        $region45: #{_lambda_.3} parent=43 // pred_check
          %p570 = pneg %p131
        $region46: #{_lambda_.3} parent=43 // pred_check_branch
          %572 = sbr.rel (%p570) target = $region48
        $region47: #{_lambda_.3} parent=43 // pred_region
          %s573 = sand.u32 %s116, 1
          %s574 = scalar_lea.sflag [#allocation3], %s573
          %s575 = sand.u32 %s116, 1
          %s576 = smul.addr %s575, 16
          %s577 = scalar_lea.vmem [#allocation2], %s576
          %579 = dma.done %s574, 256
        $region48: #{_lambda_.3} parent=43 // pred_fallthru
          _
      $region44: #{_lambda_.3} parent=5 // pred_fallthru
        _
    $region6: #{_lambda_.3} parent=1 // loop_footer
      %s17 = sadd.s32 1, %s13
    $region7: #{_lambda_.3} parent=1 // loop_footer_branch
      %12 = sbr.rel target = $region3
    $region8: #{_lambda_.3} parent=1 // loop_exit
      _
    %580 = vsyncpa [#allocation3], 1
    %s581 = scalar_lea.sflag [#allocation3], 1
    %582 = vsyncpa %s581, 1

</llo_original>
